<compile_context>
chip_gen: v5e
topology: v5e:2x2
jax: 0.10.0
libtpu: 0.0.40
codegen_flags: <defaults>
</compile_context>

<pallas_src>
import functools
import math

import jax
import jax.numpy as jnp
from jax import lax
from jax.experimental import pallas as pl
from jax.experimental.pallas import tpu as pltpu


# ----------------------------------------------------------------------------
# Pure-JAX reference (mirrors the PyTorch module exactly).  Also used to
# pre-densify the Monarch operators for the dense fast path.
# ----------------------------------------------------------------------------
def _rearrange_nm(x, s):
    # einops '... (m n) -> ... (n m)' with m = n = s (an s x s transpose of the last dim)
    xv = x.reshape(*x.shape[:-1], s, s)
    return jnp.swapaxes(xv, -1, -2).reshape(x.shape)


def _blockdiag_ref(x, w, s):
    # CUDA blockdiag_matmul_fw semantics: out[..., b, n] = sum_m w[b, n, m] * x[..., b, m]
    xv = x.reshape(*x.shape[:-1], s, s)
    out = jnp.einsum("bnm,...bm->...bn", w, xv)
    return out.reshape(x.shape)


def monarch_matrix_ref(x, L, R, s):
    x = _rearrange_nm(x, s)
    x = _blockdiag_ref(x, L, s)
    x = _rearrange_nm(x, s)
    x = _blockdiag_ref(x, R, s)
    return _rearrange_nm(x, s)


def monarch_conv_ref(x, L1, R1, L2, R2, n_kernel, s):
    z = jnp.swapaxes(x, -1, -2)                  # (..., D, N)
    z = monarch_matrix_ref(z, L1, R1, s)
    z = jnp.maximum(n_kernel * z, 0.0)           # relu(n_kernel * m1(x^T))
    z = monarch_matrix_ref(z, L2, R2, s)
    return jnp.swapaxes(z, -1, -2)               # (..., N, D)


def _monarch_dense_matrix(L, R, s):
    """Dense (N, N) matrix A (built in f32) such that applying the MonarchMatrix along
    the seq axis of a (seq, channels) tile equals A @ tile (left multiplication)."""
    n = s * s
    m = monarch_matrix_ref(jnp.eye(n, dtype=jnp.float32),
                           L.astype(jnp.float32), R.astype(jnp.float32), s)
    return m.T


# ----------------------------------------------------------------------------
# Fused Pallas kernels
# ----------------------------------------------------------------------------
def _monarch_conv_dense_kernel(x_ref, m1t_ref, m2t_ref, k_ref, o_ref):
    """Dense fast path: both Monarch operators pre-densified.

    x_ref  : (BT, N, TD)  input tile (batch-tile, seq, channel-tile)
    m1t/m2t: (N, N)       dense operators acting on the seq axis (VMEM resident)
    k_ref  : (N, TD)      n_kernel^T tile (VMEM resident across the batch loop)
    o_ref  : (BT, N, TD)
    """
    m1t = m1t_ref[...]
    m2t = m2t_ref[...]
    k = k_ref[...].astype(jnp.float32)
    for bt in range(x_ref.shape[0]):          # static, unrolled batch-tile loop
        y = jnp.dot(m1t, x_ref[bt].astype(m1t.dtype),
                    preferred_element_type=jnp.float32)
        y = jnp.maximum(k * y, 0.0)
        y = jnp.dot(m2t, y.astype(m2t.dtype), preferred_element_type=jnp.float32)
        o_ref[bt] = y.astype(o_ref.dtype)


# out[a,i,d] = sum_j w[a,i,j] * v[j,a,d]   == blockdiag(rearrange(v), w), rearrange folded
_FOLD = (((2,), (0,)), ((0,), (1,)))
# out[a,i,d] = sum_j w[a,i,j] * v[a,j,d]   == blockdiag(v, w)
_PLAIN = (((2,), (1,)), ((0,), (0,)))


def _monarch_conv_blockdiag_kernel(x_ref, l1_ref, r1_ref, l2_ref, r2_ref, k_ref, o_ref):
    """General path: keeps the block-diagonal Monarch structure (any N).

    The einops rearranges are folded into the dot_general dimension_numbers; only the
    very last rearrange survives as one swapaxes at the output store.  The intermediate
    relu(n_kernel * m1(..)) is kept in the deferred ("swapped") layout and k_ref is
    pre-laid-out in that same layout by the wrapper.

    x_ref : (BT, s, s, TD)  input tile; flattened seq index = axis1 * s + axis2
    l*/r* : (s, s, s)       Monarch block factors (VMEM resident)
    k_ref : (s, s, TD)      n_kernel^T in deferred layout: k[b, i, d] = n_kernel[d, i*s+b]
    o_ref : (BT, s, s, TD)
    """
    l1 = l1_ref[...]
    r1 = r1_ref[...]
    l2 = l2_ref[...]
    r2 = r2_ref[...]
    wt = l1.dtype
    k = k_ref[...].astype(jnp.float32)
    for bt in range(x_ref.shape[0]):          # static, unrolled batch-tile loop
        v = x_ref[bt].astype(wt)                                               # (s, s, TD)
        v = lax.dot_general(l1, v, _FOLD, preferred_element_type=jnp.float32)   # m1, stage 1
        v = lax.dot_general(r1, v.astype(wt), _FOLD,
                            preferred_element_type=jnp.float32)                 # m1, stage 2 (deferred layout)
        v = jnp.maximum(k * v, 0.0)                                              # relu(n_kernel * m1(x^T))
        v = lax.dot_general(l2, v.astype(wt), _PLAIN,
                            preferred_element_type=jnp.float32)                 # m2, stage 1 (rearranges cancel)
        v = lax.dot_general(r2, v.astype(wt), _FOLD,
                            preferred_element_type=jnp.float32)                 # m2, stage 2
        o_ref[bt] = jnp.swapaxes(v, 0, 1).astype(o_ref.dtype)                   # final rearrange at store


# ----------------------------------------------------------------------------
# Wrapper helpers
# ----------------------------------------------------------------------------
def _vmem_cap_bytes():
    """~82% of physical VMEM: ~52 MiB on v7x (64 MiB), ~105 MiB on v5e/v6e (128 MiB)."""
    try:
        return int(int(pltpu.get_tpu_info().vmem_capacity_bytes) * 0.82)
    except Exception:
        return 52 << 20   # conservative fallback, valid on every generation


def _pick_channel_tile(d, d_tile):
    """Full channel dim if it fits, else the largest multiple-of-128 divisor.
    Returns None when channels must be padded (d > d_tile, no 128-multiple divisor)."""
    if d <= d_tile:
        return d
    t = (d_tile // 128) * 128
    while t >= 128:
        if d % t == 0:
            return t
        t -= 128
    return None


def _pick_batch_tile(b, bytes_per_row, budget_bytes):
    bt = 1
    for cand in range(1, b + 1):
        if b % cand == 0 and cand * bytes_per_row <= budget_bytes:
            bt = cand
    return bt


def _compiler_params(x_tile_bytes, out_tile_bytes, k_tile_bytes, resident_bytes,
                     tmp_bytes, cap):
    # in/out tiles double-buffered + resident operators/k + f32 compute temporaries + headroom.
    est = (2 * x_tile_bytes + 2 * out_tile_bytes + 2 * k_tile_bytes
           + resident_bytes + tmp_bytes + (4 << 20))
    return pltpu.CompilerParams(
        dimension_semantics=("parallel", "parallel"),
        vmem_limit_bytes=int(min(max(est, 16 << 20), cap)),
    )


# ----------------------------------------------------------------------------
# Wrapper
# ----------------------------------------------------------------------------
def monarch_conv_forward(x, L1, R1, L2, R2, n_kernel, sqrt_n, *,
                         use_dense=None, d_tile=2048, mxu_dtype=None,
                         dense_max_n=1024):
    """Fused MonarchConv forward.  x: (..., seq=sqrt_n**2, d), n_kernel: (d, seq)."""
    s = int(sqrt_n)
    n = s * s
    *batch_shape, seq, d = x.shape
    assert seq == n, f"seq dim {seq} != sqrt_n**2 = {n}"
    assert n_kernel.shape == (d, n), f"n_kernel shape {n_kernel.shape} != {(d, n)}"
    b = int(math.prod(batch_shape))

    if mxu_dtype is None:
        # Feed the MXU bf16 when the activations already are bf16; keep f32 otherwise.
        mxu_dtype = jnp.bfloat16 if x.dtype == jnp.bfloat16 else x.dtype
    if use_dense is None:
        # Dense wins well past N=256 on the 256-wide MXUs of v6e/v7x; lower (~512) on v5e.
        use_dense = n <= dense_max_n

    cap = _vmem_cap_bytes()
    itemsize = jnp.dtype(x.dtype).itemsize

    xb = x.reshape(b, n, d)                              # free, contiguous
    k_t = jnp.asarray(n_kernel).T.astype(x.dtype)        # (N, D): n_kernel^T, input dtype

    td = _pick_channel_tile(d, d_tile)
    d_eff = d
    if td is None:
        # Pathological channels: pad to a multiple of 128 so a lane-dense, VMEM-sized
        # tile exists (padded channels are zero in and zero out; sliced off below).
        d_eff = -(-d // 128) * 128
        xb = jnp.pad(xb, ((0, 0), (0, 0), (0, d_eff - d)))
        k_t = jnp.pad(k_t, ((0, 0), (0, d_eff - d)))
        td = _pick_channel_tile(d_eff, d_tile)

    # Block several batch rows per step when channels are small (amortize ~0.35us/step).
    bytes_per_row = n * td * (4 * itemsize + 6 * 4)      # x+out double-buffered + f32 temps
    bt = _pick_batch_tile(b, bytes_per_row, cap // 3)
    # v7x megacore: keep >= 2 grid steps (when possible) so both TensorCores get work.
    if (d_eff // td) * (b // bt) < 2 and bt > 1:
        while bt > 1 and (d_eff // td) * (b // bt) < 2:
            bt -= 1
            while b % bt:
                bt -= 1
    grid = (d_eff // td, b // bt)   # channel tile outer, batch inner -> k/operators stay resident

    x_tile_bytes = bt * n * td * itemsize
    out_tile_bytes = x_tile_bytes
    k_tile_bytes = n * td * itemsize
    tmp_bytes = 6 * n * td * 4

    if use_dense:
        # Densify in f32 (preserves factored summation accuracy), cast only the final
        # operator matrices to the MXU feed dtype.
        a1 = _monarch_dense_matrix(L1, R1, s).astype(mxu_dtype)   # (N, N)
        a2 = _monarch_dense_matrix(L2, R2, s).astype(mxu_dtype)
        op_bytes = 2 * n * n * jnp.dtype(mxu_dtype).itemsize
        flops = b * (4 * n * n * d_eff + 4 * n * d_eff)
        bytes_accessed = 2 * b * n * d_eff * itemsize + n * d_eff * itemsize + op_bytes
        out = pl.pallas_call(
            _monarch_conv_dense_kernel,
            out_shape=jax.ShapeDtypeStruct((b, n, d_eff), x.dtype),
            grid=grid,
            in_specs=[
                pl.BlockSpec((bt, n, td), lambda j, i: (i, 0, j)),
                pl.BlockSpec((n, n), lambda j, i: (0, 0)),     # VMEM-resident
                pl.BlockSpec((n, n), lambda j, i: (0, 0)),     # VMEM-resident
                pl.BlockSpec((n, td), lambda j, i: (0, j)),    # resident across inner batch loop
            ],
            out_specs=pl.BlockSpec((bt, n, td), lambda j, i: (i, 0, j)),
            compiler_params=_compiler_params(x_tile_bytes, out_tile_bytes, k_tile_bytes,
                                             op_bytes, tmp_bytes, cap),
            cost_estimate=pl.CostEstimate(flops=flops, transcendentals=0,
                                          bytes_accessed=bytes_accessed),
        )(xb, a1, a2, k_t)
        out = out.reshape(b, n, d_eff)
    else:
        # General block-diagonal path (weights stay (s, s, s); valid for any N).
        l1 = jnp.asarray(L1).astype(mxu_dtype)
        r1 = jnp.asarray(R1).astype(mxu_dtype)
        l2 = jnp.asarray(L2).astype(mxu_dtype)
        r2 = jnp.asarray(R2).astype(mxu_dtype)
        # n_kernel^T in the deferred layout used between m1 and m2: k_sw[b, i, d] = k_t[i*s+b, d]
        k_sw = jnp.swapaxes(k_t.reshape(s, s, d_eff), 0, 1)
        xb4 = xb.reshape(b, s, s, d_eff)                 # free, contiguous
        op_bytes = 4 * s ** 3 * jnp.dtype(mxu_dtype).itemsize
        flops = b * (8 * s ** 3 * d_eff + 4 * n * d_eff)
        bytes_accessed = 2 * b * n * d_eff * itemsize + n * d_eff * itemsize + op_bytes
        out = pl.pallas_call(
            _monarch_conv_blockdiag_kernel,
            out_shape=jax.ShapeDtypeStruct((b, s, s, d_eff), x.dtype),
            grid=grid,
            in_specs=[
                pl.BlockSpec((bt, s, s, td), lambda j, i: (i, 0, 0, j)),
                pl.BlockSpec((s, s, s), lambda j, i: (0, 0, 0)),   # VMEM-resident
                pl.BlockSpec((s, s, s), lambda j, i: (0, 0, 0)),   # VMEM-resident
                pl.BlockSpec((s, s, s), lambda j, i: (0, 0, 0)),   # VMEM-resident
                pl.BlockSpec((s, s, s), lambda j, i: (0, 0, 0)),   # VMEM-resident
                pl.BlockSpec((s, s, td), lambda j, i: (0, 0, j)),  # resident across batch loop
            ],
            out_specs=pl.BlockSpec((bt, s, s, td), lambda j, i: (i, 0, 0, j)),
            compiler_params=_compiler_params(x_tile_bytes, out_tile_bytes, k_tile_bytes,
                                             op_bytes, tmp_bytes, cap),
            cost_estimate=pl.CostEstimate(flops=flops, transcendentals=0,
                                          bytes_accessed=bytes_accessed),
        )(xb4, l1, r1, l2, r2, k_sw)
        out = out.reshape(b, n, d_eff)

    if d_eff != d:
        out = out[..., :d]
    return out.reshape(*batch_shape, n, d)


# ----------------------------------------------------------------------------
# Demo / self-check
# ----------------------------------------------------------------------------
if __name__ == "__main__":
    sqrt_n, sqrt_d = 8, 4
    N, D = sqrt_n ** 2, sqrt_d ** 2            # seq = 64, channels = 16
    batch = 2

    key = jax.random.PRNGKey(0)
    kx, kl1, kr1, kl2, kr2, kn = jax.random.split(key, 6)
    x = jax.random.normal(kx, (batch, N, D), dtype=jnp.float32)
    L1 = jax.random.normal(kl1, (sqrt_n, sqrt_n, sqrt_n), dtype=jnp.float32)
    R1 = jax.random.normal(kr1, (sqrt_n, sqrt_n, sqrt_n), dtype=jnp.float32)
    L2 = jax.random.normal(kl2, (sqrt_n, sqrt_n, sqrt_n), dtype=jnp.float32)
    R2 = jax.random.normal(kr2, (sqrt_n, sqrt_n, sqrt_n), dtype=jnp.float32)
    n_kernel = jax.random.normal(kn, (D, N), dtype=jnp.float32)

    ref = monarch_conv_ref(x, L1, R1, L2, R2, n_kernel, sqrt_n)
    ref_max = float(jnp.max(jnp.abs(ref)))

    # 1) f32 runs: exercise both fused paths (dense fast path and block-diagonal path).
    tol_f32 = 1e-4 * ref_max + 1e-4
    for use_dense in (True, False):
        fwd = jax.jit(functools.partial(monarch_conv_forward, sqrt_n=sqrt_n,
                                        use_dense=use_dense))
        out = jax.block_until_ready(fwd(x, L1, R1, L2, R2, n_kernel))
        assert out.shape == x.shape
        err = float(jnp.max(jnp.abs(out - ref)))
        assert err <= tol_f32, f"f32 use_dense={use_dense}: max_err={err} tol={tol_f32}"

    # 2) bf16 activations: exercises the bf16-fed MXU path (dense), looser tolerance.
    x_bf16 = x.astype(jnp.bfloat16)
    fwd_bf16 = jax.jit(functools.partial(monarch_conv_forward, sqrt_n=sqrt_n,
                                         use_dense=True))
    out_bf16 = jax.block_until_ready(fwd_bf16(x_bf16, L1, R1, L2, R2, n_kernel))
    assert out_bf16.shape == x.shape and out_bf16.dtype == jnp.bfloat16
    err_bf16 = float(jnp.max(jnp.abs(out_bf16.astype(jnp.float32) - ref)))
    tol_bf16 = 8e-2 * ref_max + 8e-2
    assert err_bf16 <= tol_bf16, f"bf16 dense: max_err={err_bf16} tol={tol_bf16}"

    print("KERNEL_OK")
</pallas_src>

<mosaic_0001>
module attributes {stable_mosaic.version = 11 : i64} {
  func.func @_monarch_conv_dense_kernel(%arg0: i32, %arg1: i32, %arg2: memref<1x64x16xf32, #tpu.memory_space<vmem>>, %arg3: memref<64x64xf32, #tpu.memory_space<vmem>>, %arg4: memref<64x64xf32, #tpu.memory_space<vmem>>, %arg5: memref<64x16xf32, #tpu.memory_space<vmem>>, %arg6: memref<1x64x16xf32, #tpu.memory_space<vmem>>) attributes {dimension_semantics = [#tpu.dimension_semantics<parallel>, #tpu.dimension_semantics<parallel>], iteration_bounds = array<i64: 1, 2>, scalar_prefetch = 0 : i64, scratch_operands = 0 : i64, tpu.core_type = #tpu.core_type<tc>, window_params = [{transform_indices = @transform_0, window_bounds = array<i64: 1, 64, 16>}, {pipeline_mode = #tpu.pipeline_mode<synchronous>, transform_indices = @transform_1, window_bounds = array<i64: 64, 64>}, {pipeline_mode = #tpu.pipeline_mode<synchronous>, transform_indices = @transform_2, window_bounds = array<i64: 64, 64>}, {transform_indices = @transform_3, window_bounds = array<i64: 64, 16>}, {transform_indices = @transform_4, window_bounds = array<i64: 1, 64, 16>}]} {
    %c0 = arith.constant 0 : index
    %c0_0 = arith.constant 0 : index
    %0 = vector.load %arg3[%c0, %c0_0] : memref<64x64xf32, #tpu.memory_space<vmem>>, vector<64x64xf32>
    %c0_1 = arith.constant 0 : index
    %c0_2 = arith.constant 0 : index
    %1 = vector.load %arg4[%c0_1, %c0_2] : memref<64x64xf32, #tpu.memory_space<vmem>>, vector<64x64xf32>
    %c0_3 = arith.constant 0 : index
    %c0_4 = arith.constant 0 : index
    %2 = vector.load %arg5[%c0_3, %c0_4] : memref<64x16xf32, #tpu.memory_space<vmem>>, vector<64x16xf32>
    %c0_5 = arith.constant 0 : index
    %c0_6 = arith.constant 0 : index
    %c0_7 = arith.constant 0 : index
    %3 = vector.load %arg2[%c0_5, %c0_6, %c0_7] : memref<1x64x16xf32, #tpu.memory_space<vmem>>, vector<1x64x16xf32>
    %4 = vector.shape_cast %3 : vector<1x64x16xf32> to vector<64x16xf32>
    %cst = arith.constant dense<0.000000e+00> : vector<64x16xf32>
    %5 = tpu.matmul %0, %4, %cst {dimension_numbers = #tpu.dot_dimension_numbers<[1], [0], [0], [1], [0, 0, 1, 1], [], []>} : vector<64x64xf32>, vector<64x16xf32>, vector<64x16xf32> -> vector<64x16xf32>
    %6 = arith.mulf %2, %5 : vector<64x16xf32>
    %cst_8 = arith.constant 0.000000e+00 : f32
    %7 = vector.broadcast %cst_8 : f32 to vector<64x16xf32>
    %8 = arith.maximumf %6, %7 : vector<64x16xf32>
    %cst_9 = arith.constant dense<0.000000e+00> : vector<64x16xf32>
    %9 = tpu.matmul %1, %8, %cst_9 {dimension_numbers = #tpu.dot_dimension_numbers<[1], [0], [0], [1], [0, 0, 1, 1], [], []>} : vector<64x64xf32>, vector<64x16xf32>, vector<64x16xf32> -> vector<64x16xf32>
    %c0_10 = arith.constant 0 : index
    %c0_11 = arith.constant 0 : index
    %c0_12 = arith.constant 0 : index
    %10 = vector.load %arg6[%c0_10, %c0_11, %c0_12] : memref<1x64x16xf32, #tpu.memory_space<vmem>>, vector<1x64x16xf32>
    %11 = vector.shape_cast %10 : vector<1x64x16xf32> to vector<64x16xf32>
    %12 = vector.shape_cast %9 : vector<64x16xf32> to vector<1x64x16xf32>
    tpu.vector_store %arg6[%c0_10, %c0_11, %c0_12], %12 {strides = array<i32>} : memref<1x64x16xf32, #tpu.memory_space<vmem>>, vector<1x64x16xf32>,
    return
  }
  func.func @transform_0(%arg0: i32, %arg1: i32) -> (i32, i32, i32) {
    %c0_i32 = arith.constant 0 : i32
    %c0_i32_0 = arith.constant 0 : i32
    return %arg1, %c0_i32, %arg0 : i32, i32, i32
  }
  func.func @transform_1(%arg0: i32, %arg1: i32) -> (i32, i32) {
    %c0_i32 = arith.constant 0 : i32
    %c0_i32_0 = arith.constant 0 : i32
    %c0_i32_1 = arith.constant 0 : i32
    return %c0_i32, %c0_i32_0 : i32, i32
  }
  func.func @transform_2(%arg0: i32, %arg1: i32) -> (i32, i32) {
    %c0_i32 = arith.constant 0 : i32
    %c0_i32_0 = arith.constant 0 : i32
    %c0_i32_1 = arith.constant 0 : i32
    return %c0_i32, %c0_i32_0 : i32, i32
  }
  func.func @transform_3(%arg0: i32, %arg1: i32) -> (i32, i32) {
    %c0_i32 = arith.constant 0 : i32
    %c0_i32_0 = arith.constant 0 : i32
    return %c0_i32, %arg0 : i32, i32
  }
  func.func @transform_4(%arg0: i32, %arg1: i32) -> (i32, i32, i32) {
    %c0_i32 = arith.constant 0 : i32
    %c0_i32_0 = arith.constant 0 : i32
    return %arg1, %c0_i32, %arg0 : i32, i32, i32
  }
}

</mosaic_0001>

<llo_original>
// kernel: monarch_conv_forward.1
$region0: #{monarch_conv_forward.1}
  #allocation0 [shape = 'u32[]', space=smem, size = 0x4, offset = 0x4, fixed_abs, tag = 'smem constant byte address 0x4 - core index']
  #allocation1 [shape = 'u32[72,128]{1,0:T(1,128)}', space=vmem, size = 0x9000, scoped, tag = 'internal scratch']
  %s0 = inlined_call_operand.vmem [shape: f32[2,64,16], index: 0, kind: input, shape index: {}]
  %s1 = inlined_call_operand.vmem [shape: f32[64,64], index: 1, kind: input, shape index: {}]
  %s2 = inlined_call_operand.vmem [shape: f32[64,64], index: 2, kind: input, shape index: {}]
  %s3 = inlined_call_operand.vmem [shape: f32[64,16], index: 3, kind: input, shape index: {}]
  %s4 = inlined_call_operand.vmem [shape: f32[2,64,16], index: 4, kind: output, shape index: {}]
  %s5 = sld [smem:[#allocation0]]
  $region49: #{monarch_conv_forward.1} parent=0
    _
  %s7 = ssub.s32 1, %s5
  %s8 = scalar_select 0, %s7, %s5
  loop: start=0, step=1, limit=4
  $region2: #{monarch_conv_forward.1} parent=0 // loop_pre_header
    _
  $region3: #{monarch_conv_forward.1} parent=0 // loop_header
    %s10 = sphi 0, %s14
    %p11 = scmp.ge.s32.totalorder %s10, 4
    %s17 = sphi 0, %s29
    %s18 = sphi 0, %s25
    %s19 = sphi 0, %s17
    %s20 = sphi 0, %s18
    %s21 = sphi 0, %s19
    %s22 = sphi 0, %s20
    %s34 = sphi 0, %s36
    %s37 = sphi 0, %s34
    %s38 = sphi 0, %s37
    %s54 = sphi 0, %s38
    %s58 = sphi 0, %s58
    %s60 = sphi 0, %s58
    %s61 = sphi 0, %s60
    %s75 = sphi 0, %s61
    %s79 = sphi 0, %s79
    %s81 = sphi 0, %s79
    %s82 = sphi 0, %s81
    %s96 = sphi 0, %s82
    %s102 = sphi 0, %s104
    %s105 = sphi 0, %s102
    %s106 = sphi 0, %s105
    %s122 = sphi 0, %s106
    %s130 = sphi 0, %s132
    %s133 = sphi 0, %s130
    %s134 = sphi 0, %s133
    %s150 = sphi 0, %s134
  $region4: #{monarch_conv_forward.1} parent=0 // loop_header_branch
    %13 = sbr.rel (%p11) target = $region8
  $region5: #{monarch_conv_forward.1} parent=0 // loop_body
    %s15 = ssub.s32 %s10, 1
    %s16 = ssub.s32 %s10, 2
    %s23 = sadd.s32 1, %s18
    %p24 = scmp.ge.s32.totalorder %s23, 2
    %s25 = scalar_select %p24, 0, %s23
    %s26 = sadd.s32 1, %s17
    %s27 = scalar_select %p24, %s26, %s17
    %p28 = scmp.ge.s32.totalorder %s27, 1
    %s29 = scalar_select %p28, 0, %s27
    %s30 = ssub.s32 %s18, %s25
    %s31 = ssub.s32 %s17, %s29
    %s32 = sor.u32 %s30, %s31
    %p33 = scmp.eq.s32.totalorder %s32, 0
    %s35 = sadd.s32 %s34, 1
    %s36 = scalar_select %p33, %s34, %s35
    %p39 = pneg %p33
    %p40 = scmp.eq.s32.totalorder %s10, 1
    %p41 = por %p39, %p40
    %p42 = scmp.ne.s32.totalorder %s34, %s37
    %p43 = scmp.eq.s32.totalorder %s10, 0
    %p44 = por %p42, %p43
    %p45 = scmp.ne.s32.totalorder %s34, %s37
    %p46 = scmp.eq.s32.totalorder %s15, 1
    %p47 = por %p45, %p46
    %p48 = scmp.ne.s32.totalorder %s37, %s38
    %p49 = scmp.eq.s32.totalorder %s15, 0
    %p50 = por %p48, %p49
    %p51 = scmp.ne.s32.totalorder %s37, %s38
    %p52 = scmp.eq.s32.totalorder %s16, 1
    %p53 = por %p51, %p52
    %p55 = scmp.ne.s32.totalorder %s38, %s54
    %p56 = scmp.eq.s32.totalorder %s16, 0
    %p57 = por %p55, %p56
    %s59 = sadd.s32 %s58, 1
    %p62 = scmp.eq.s32.totalorder %s10, 1
    %p63 = scmp.ne.s32.totalorder %s58, %s60
    %p64 = scmp.eq.s32.totalorder %s10, 0
    %p65 = por %p63, %p64
    %p66 = scmp.ne.s32.totalorder %s58, %s60
    %p67 = scmp.eq.s32.totalorder %s15, 1
    %p68 = por %p66, %p67
    %p69 = scmp.ne.s32.totalorder %s60, %s61
    %p70 = scmp.eq.s32.totalorder %s15, 0
    %p71 = por %p69, %p70
    %p72 = scmp.ne.s32.totalorder %s60, %s61
    %p73 = scmp.eq.s32.totalorder %s16, 1
    %p74 = por %p72, %p73
    %p76 = scmp.ne.s32.totalorder %s61, %s75
    %p77 = scmp.eq.s32.totalorder %s16, 0
    %p78 = por %p76, %p77
    %s80 = sadd.s32 %s79, 1
    %p83 = scmp.eq.s32.totalorder %s10, 1
    %p84 = scmp.ne.s32.totalorder %s79, %s81
    %p85 = scmp.eq.s32.totalorder %s10, 0
    %p86 = por %p84, %p85
    %p87 = scmp.ne.s32.totalorder %s79, %s81
    %p88 = scmp.eq.s32.totalorder %s15, 1
    %p89 = por %p87, %p88
    %p90 = scmp.ne.s32.totalorder %s81, %s82
    %p91 = scmp.eq.s32.totalorder %s15, 0
    %p92 = por %p90, %p91
    %p93 = scmp.ne.s32.totalorder %s81, %s82
    %p94 = scmp.eq.s32.totalorder %s16, 1
    %p95 = por %p93, %p94
    %p97 = scmp.ne.s32.totalorder %s82, %s96
    %p98 = scmp.eq.s32.totalorder %s16, 0
    %p99 = por %p97, %p98
    %s100 = ssub.s32 %s17, %s29
    %p101 = scmp.eq.s32.totalorder %s100, 0
    %s103 = sadd.s32 %s102, 1
    %s104 = scalar_select %p101, %s102, %s103
    %p107 = pneg %p101
    %p108 = scmp.eq.s32.totalorder %s10, 1
    %p109 = por %p107, %p108
    %p110 = scmp.ne.s32.totalorder %s102, %s105
    %p111 = scmp.eq.s32.totalorder %s10, 0
    %p112 = por %p110, %p111
    %p113 = scmp.ne.s32.totalorder %s102, %s105
    %p114 = scmp.eq.s32.totalorder %s15, 1
    %p115 = por %p113, %p114
    %p116 = scmp.ne.s32.totalorder %s105, %s106
    %p117 = scmp.eq.s32.totalorder %s15, 0
    %p118 = por %p116, %p117
    %p119 = scmp.ne.s32.totalorder %s105, %s106
    %p120 = scmp.eq.s32.totalorder %s16, 1
    %p121 = por %p119, %p120
    %p123 = scmp.ne.s32.totalorder %s106, %s122
    %p124 = scmp.eq.s32.totalorder %s16, 0
    %p125 = por %p123, %p124
    %s126 = ssub.s32 %s18, %s25
    %s127 = ssub.s32 %s17, %s29
    %s128 = sor.u32 %s126, %s127
    %p129 = scmp.eq.s32.totalorder %s128, 0
    %s131 = sadd.s32 %s130, 1
    %s132 = scalar_select %p129, %s130, %s131
    %p135 = pneg %p129
    %p136 = scmp.eq.s32.totalorder %s10, 1
    %p137 = por %p135, %p136
    %p138 = scmp.ne.s32.totalorder %s130, %s133
    %p139 = scmp.eq.s32.totalorder %s10, 0
    %p140 = por %p138, %p139
    %p141 = scmp.ne.s32.totalorder %s130, %s133
    %p142 = scmp.eq.s32.totalorder %s15, 1
    %p143 = por %p141, %p142
    %p144 = scmp.ne.s32.totalorder %s133, %s134
    %p145 = scmp.eq.s32.totalorder %s15, 0
    %p146 = por %p144, %p145
    %p147 = scmp.ne.s32.totalorder %s133, %s134
    %p148 = scmp.eq.s32.totalorder %s16, 1
    %p149 = por %p147, %p148
    %p151 = scmp.ne.s32.totalorder %s134, %s150
    %p152 = scmp.eq.s32.totalorder %s16, 0
    %p153 = por %p151, %p152
    %p154 = scmp.le.s32.totalorder 1, %s10
    %p155 = scmp.lt.s32.totalorder %s10, 3
    %p156 = pnand %p154, %p155
    %p157 = pneg %p156
    // Predicated region
    $region9: #{monarch_conv_forward.1} parent=5 // pred_check
      _
    $region10: #{monarch_conv_forward.1} parent=5 // pred_check_branch
      %159 = sbr.rel (%p156) target = $region12
    $region11: #{monarch_conv_forward.1} parent=5 // pred_region
      %s160 = ssub.s32 %s10, 1
      // Predicated region
      $region13: #{monarch_conv_forward.1} parent=11 // pred_check
        %p161 = pneg %p71
      $region14: #{monarch_conv_forward.1} parent=11 // pred_check_branch
        %163 = sbr.rel (%p161) target = $region16
      $region15: #{monarch_conv_forward.1} parent=11 // pred_region
        _
      $region16: #{monarch_conv_forward.1} parent=11 // pred_fallthru
        _
      // Predicated region
      $region17: #{monarch_conv_forward.1} parent=11 // pred_check
        %p164 = pneg %p92
      $region18: #{monarch_conv_forward.1} parent=11 // pred_check_branch
        %166 = sbr.rel (%p164) target = $region20
      $region19: #{monarch_conv_forward.1} parent=11 // pred_region
        _
      $region20: #{monarch_conv_forward.1} parent=11 // pred_fallthru
        _
      // Predicated region
      $region21: #{monarch_conv_forward.1} parent=11 // pred_check
        %p167 = pneg %p118
      $region22: #{monarch_conv_forward.1} parent=11 // pred_check_branch
        %169 = sbr.rel (%p167) target = $region24
      $region23: #{monarch_conv_forward.1} parent=11 // pred_region
        %p170 = scmp.lt.s32.totalorder %s19, 0
        %s171 = scalar_select %p170, %s19, 0
        %s172 = smul.addr %s171, 8
        %s173 = scalar_lea.vmem %s3, %s172
      $region24: #{monarch_conv_forward.1} parent=11 // pred_fallthru
        _
    $region12: #{monarch_conv_forward.1} parent=5 // pred_fallthru
      _
    %p174 = scmp.lt.s32.totalorder %s10, 2
    // Predicated region
    $region25: #{monarch_conv_forward.1} parent=5 // pred_check
      %p175 = pneg %p174
    $region26: #{monarch_conv_forward.1} parent=5 // pred_check_branch
      %177 = sbr.rel (%p175) target = $region28
    $region27: #{monarch_conv_forward.1} parent=5 // pred_region
      // Predicated region
      $region29: #{monarch_conv_forward.1} parent=27 // pred_check
        %p178 = pneg %p44
      $region30: #{monarch_conv_forward.1} parent=27 // pred_check_branch
        %180 = sbr.rel (%p178) target = $region32
      $region31: #{monarch_conv_forward.1} parent=27 // pred_region
        %p181 = scmp.lt.s32.totalorder %s18, 1
        %s182 = scalar_select %p181, %s18, 1
        %p183 = scmp.lt.s32.totalorder %s17, 0
        %s184 = scalar_select %p183, %s17, 0
        %s185 = smul.addr %s182, 8
        %s186 = sadd.s32 %s184, %s185
        %s187 = smul.addr %s186, 8
        %s188 = scalar_lea.vmem %s0, %s187
      $region32: #{monarch_conv_forward.1} parent=27 // pred_fallthru
        _
    $region28: #{monarch_conv_forward.1} parent=5 // pred_fallthru
      _
    %p189 = scmp.le.s32.totalorder 1, %s10
    %p190 = scmp.lt.s32.totalorder %s10, 3
    %p191 = pnand %p189, %p190
    %p192 = pneg %p191
    // Predicated region
    $region33: #{monarch_conv_forward.1} parent=5 // pred_check
      _
    $region34: #{monarch_conv_forward.1} parent=5 // pred_check_branch
      %194 = sbr.rel (%p191) target = $region36
    $region35: #{monarch_conv_forward.1} parent=5 // pred_region
      %s195 = ssub.s32 %s10, 1
      %p196 = scmp.lt.s32.totalorder %s20, 1
      %s197 = scalar_select %p196, %s20, 1
      %p198 = scmp.lt.s32.totalorder %s19, 0
      %s199 = scalar_select %p198, %s19, 0
      %s200 = smul.addr %s197, 8
      %s201 = sadd.s32 %s199, %s200
      %s202 = smul.addr %s201, 8
      %s203 = scalar_lea.vmem %s0, %s202
      %p204 = pneg %p50
      %p205 = pneg %p47
      %p206 = pneg %p71
      %p207 = pneg %p68
      %p208 = pneg %p92
      %p209 = pneg %p89
      %p210 = scmp.lt.s32.totalorder %s19, 0
      %s211 = scalar_select %p210, %s19, 0
      %s212 = smul.addr %s211, 8
      %s213 = scalar_lea.vmem %s3, %s212
      %p214 = pneg %p118
      %p215 = pneg %p115
      %p216 = pneg %p146
      %p217 = pneg %p143
      %p218 = scmp.lt.s32.totalorder %s20, 1
      %s219 = scalar_select %p218, %s20, 1
      %p220 = scmp.lt.s32.totalorder %s19, 0
      %s221 = scalar_select %p220, %s19, 0
      %s222 = smul.addr %s219, 8
      %s223 = sadd.s32 %s221, %s222
      %s224 = smul.addr %s223, 8
      %s225 = scalar_lea.vmem %s4, %s224
      %p226 = scmp.lt.s32.totalorder %s20, 1
      %s227 = scalar_select %p226, %s20, 1
      %p228 = scmp.lt.s32.totalorder %s19, 0
      %s229 = scalar_select %p228, %s19, 0
      %s230 = smul.addr %s227, 8
      %s231 = sadd.s32 %s229, %s230
      %s232 = smul.addr %s231, 8
      %s233 = scalar_lea.vmem %s0, %s232
      %p234 = scmp.lt.s32.totalorder %s19, 0
      %s235 = scalar_select %p234, %s19, 0
      %s236 = smul.addr %s235, 8
      %s237 = scalar_lea.vmem %s3, %s236
      %p238 = scmp.lt.s32.totalorder %s20, 1
      %s239 = scalar_select %p238, %s20, 1
      %p240 = scmp.lt.s32.totalorder %s19, 0
      %s241 = scalar_select %p240, %s19, 0
      %s242 = smul.addr %s239, 8
      %s243 = sadd.s32 %s241, %s242
      %s244 = smul.addr %s243, 8
      %s245 = scalar_lea.vmem %s4, %s244
      %v246 = vld [vmem:[%s1] sm:$0xff]
      %v247 = vld [vmem:[%s1 + $0x8] sm:$0xff]
      %v248 = vld [vmem:[%s1 + $0x10] sm:$0xff]
      %v249 = vld [vmem:[%s1 + $0x18] sm:$0xff]
      %v250 = vld [vmem:[%s1 + $0x20] sm:$0xff]
      %v251 = vld [vmem:[%s1 + $0x28] sm:$0xff]
      %v252 = vld [vmem:[%s1 + $0x30] sm:$0xff]
      %v253 = vld [vmem:[%s1 + $0x38] sm:$0xff]
      %v254 = vld [vmem:[%s2] sm:$0xff]
      %v255 = vld [vmem:[%s2 + $0x8] sm:$0xff]
      %v256 = vld [vmem:[%s2 + $0x10] sm:$0xff]
      %v257 = vld [vmem:[%s2 + $0x18] sm:$0xff]
      %v258 = vld [vmem:[%s2 + $0x20] sm:$0xff]
      %v259 = vld [vmem:[%s2 + $0x28] sm:$0xff]
      %v260 = vld [vmem:[%s2 + $0x30] sm:$0xff]
      %v261 = vld [vmem:[%s2 + $0x38] sm:$0xff]
      %v262 = vld [vmem:[%s237] sm:$0xff]
      %v263 = vld [vmem:[%s237 + $0x8] sm:$0xff]
      %v264 = vld [vmem:[%s237 + $0x10] sm:$0xff]
      %v265 = vld [vmem:[%s237 + $0x18] sm:$0xff]
      %v266 = vld [vmem:[%s237 + $0x20] sm:$0xff]
      %v267 = vld [vmem:[%s237 + $0x28] sm:$0xff]
      %v268 = vld [vmem:[%s237 + $0x30] sm:$0xff]
      %v269 = vld [vmem:[%s237 + $0x38] sm:$0xff]
      %v270 = vld [vmem:[%s233] sm:$0xff]
      %v271 = vld [vmem:[%s233 + $0x8] sm:$0xff]
      %v272 = vld [vmem:[%s233 + $0x10] sm:$0xff]
      %v273 = vld [vmem:[%s233 + $0x18] sm:$0xff]
      %v274 = vld [vmem:[%s233 + $0x20] sm:$0xff]
      %v275 = vld [vmem:[%s233 + $0x28] sm:$0xff]
      %v276 = vld [vmem:[%s233 + $0x30] sm:$0xff]
      %v277 = vld [vmem:[%s233 + $0x38] sm:$0xff]
      %vm278 = vcmask 523264
      %v280 = vsel %vm278, %v246, 0
      %v283 = vsel %vm278, %v247, 0
      %v286 = vsel %vm278, %v248, 0
      %v289 = vsel %vm278, %v249, 0
      %v292 = vsel %vm278, %v250, 0
      %v295 = vsel %vm278, %v251, 0
      %v298 = vsel %vm278, %v252, 0
      %v301 = vsel %vm278, %v253, 0
      %303 = vmatpush.msra.mxu0 0.0
      %304 = vmatpush.msra.mxu0 0.0
      %305 = vmatpush.msra.mxu0 0.0
      %306 = vmatpush.msra.mxu0 0.0
      %307 = vmatpush.msra.mxu0 0.0
      %308 = vmatpush.msra.mxu0 0.0
      %309 = vmatpush.msra.mxu0 0.0
      %310 = vmatpush.msra.mxu0 0.0
      %311 = vmatpush.msra.mxu0 %v277
      %312 = vmatpush.msra.mxu0 %v276
      %313 = vmatpush.msra.mxu0 %v275
      %314 = vmatpush.msra.mxu0 %v274
      %315 = vmatpush.msra.mxu0 %v273
      %316 = vmatpush.msra.mxu0 %v272
      %317 = vmatpush.msra.mxu0 %v271
      %318 = vmatpush.msra.mxu0 %v270
      %319 = vmatmul.f32.gmra.mxu0 %v280
      %v320 = vpop.f32.mrf.mxu0
      %v321 = vadd.f32 0.0, %v320
      %322 = vmatmul.f32.gmra.mxu0 %v283
      %v323 = vpop.f32.mrf.mxu0
      %v324 = vadd.f32 0.0, %v323
      %325 = vmatmul.f32.gmra.mxu0 %v286
      %v326 = vpop.f32.mrf.mxu0
      %v327 = vadd.f32 0.0, %v326
      %328 = vmatmul.f32.gmra.mxu0 %v289
      %v329 = vpop.f32.mrf.mxu0
      %v330 = vadd.f32 0.0, %v329
      %331 = vmatmul.f32.gmra.mxu0 %v292
      %v332 = vpop.f32.mrf.mxu0
      %v333 = vadd.f32 0.0, %v332
      %334 = vmatmul.f32.gmra.mxu0 %v295
      %v335 = vpop.f32.mrf.mxu0
      %v336 = vadd.f32 0.0, %v335
      %337 = vmatmul.f32.gmra.mxu0 %v298
      %v338 = vpop.f32.mrf.mxu0
      %v339 = vadd.f32 0.0, %v338
      %340 = vmatmul.f32.gmra.mxu0 %v301
      %v341 = vpop.f32.mrf.mxu0
      %v342 = vadd.f32 0.0, %v341
      %343 = vdwg.mxu0
      %v344 = vmul.f32 %v262, %v321
      %v345 = vmul.f32 %v263, %v324
      %v346 = vmul.f32 %v264, %v327
      %v347 = vmul.f32 %v265, %v330
      %v348 = vmul.f32 %v266, %v333
      %v349 = vmul.f32 %v267, %v336
      %v350 = vmul.f32 %v268, %v339
      %v351 = vmul.f32 %v269, %v342
      %v352 = vmax.f32 %v344, 0.0
      %v353 = vmax.f32 %v345, 0.0
      %v354 = vmax.f32 %v346, 0.0
      %v355 = vmax.f32 %v347, 0.0
      %v356 = vmax.f32 %v348, 0.0
      %v357 = vmax.f32 %v349, 0.0
      %v358 = vmax.f32 %v350, 0.0
      %v359 = vmax.f32 %v351, 0.0
      %v361 = vsel %vm278, %v254, 0
      %v364 = vsel %vm278, %v255, 0
      %v367 = vsel %vm278, %v256, 0
      %v370 = vsel %vm278, %v257, 0
      %v373 = vsel %vm278, %v258, 0
      %v376 = vsel %vm278, %v259, 0
      %v379 = vsel %vm278, %v260, 0
      %v382 = vsel %vm278, %v261, 0
      %384 = vmatpush.msra.mxu0 0.0
      %385 = vmatpush.msra.mxu0 0.0
      %386 = vmatpush.msra.mxu0 0.0
      %387 = vmatpush.msra.mxu0 0.0
      %388 = vmatpush.msra.mxu0 0.0
      %389 = vmatpush.msra.mxu0 0.0
      %390 = vmatpush.msra.mxu0 0.0
      %391 = vmatpush.msra.mxu0 0.0
      %392 = vmatpush.msra.mxu0 %v359
      %393 = vmatpush.msra.mxu0 %v358
      %394 = vmatpush.msra.mxu0 %v357
      %395 = vmatpush.msra.mxu0 %v356
      %396 = vmatpush.msra.mxu0 %v355
      %397 = vmatpush.msra.mxu0 %v354
      %398 = vmatpush.msra.mxu0 %v353
      %399 = vmatpush.msra.mxu0 %v352
      %400 = vmatmul.f32.gmra.mxu0 %v361
      %v401 = vpop.f32.mrf.mxu0
      %v402 = vadd.f32 0.0, %v401
      %403 = vmatmul.f32.gmra.mxu0 %v364
      %v404 = vpop.f32.mrf.mxu0
      %v405 = vadd.f32 0.0, %v404
      %406 = vmatmul.f32.gmra.mxu0 %v367
      %v407 = vpop.f32.mrf.mxu0
      %v408 = vadd.f32 0.0, %v407
      %409 = vmatmul.f32.gmra.mxu0 %v370
      %v410 = vpop.f32.mrf.mxu0
      %v411 = vadd.f32 0.0, %v410
      %412 = vmatmul.f32.gmra.mxu0 %v373
      %v413 = vpop.f32.mrf.mxu0
      %v414 = vadd.f32 0.0, %v413
      %415 = vmatmul.f32.gmra.mxu0 %v376
      %v416 = vpop.f32.mrf.mxu0
      %v417 = vadd.f32 0.0, %v416
      %418 = vmatmul.f32.gmra.mxu0 %v379
      %v419 = vpop.f32.mrf.mxu0
      %v420 = vadd.f32 0.0, %v419
      %421 = vmatmul.f32.gmra.mxu0 %v382
      %v422 = vpop.f32.mrf.mxu0
      %v423 = vadd.f32 0.0, %v422
      %424 = vdwg.mxu0
      %vm425 = vcmask 130048
      %426 = vst.msk [vmem:[%s245] sm:$0xff] %vm425, %v402
      %427 = vst.msk [vmem:[%s245 + $0x8] sm:$0xff] %vm425, %v405
      %428 = vst.msk [vmem:[%s245 + $0x10] sm:$0xff] %vm425, %v408
      %429 = vst.msk [vmem:[%s245 + $0x18] sm:$0xff] %vm425, %v411
      %430 = vst.msk [vmem:[%s245 + $0x20] sm:$0xff] %vm425, %v414
      %431 = vst.msk [vmem:[%s245 + $0x28] sm:$0xff] %vm425, %v417
      %432 = vst.msk [vmem:[%s245 + $0x30] sm:$0xff] %vm425, %v420
      %433 = vst.msk [vmem:[%s245 + $0x38] sm:$0xff] %vm425, %v423
      %p434 = scmp.lt.s32.totalorder %s20, 1
      %s435 = scalar_select %p434, %s20, 1
      %p436 = scmp.lt.s32.totalorder %s19, 0
      %s437 = scalar_select %p436, %s19, 0
      %s438 = smul.addr %s435, 8
      %s439 = sadd.s32 %s437, %s438
      %s440 = smul.addr %s439, 8
      %s441 = scalar_lea.vmem %s4, %s440
      // Predicated region
      $region37: #{monarch_conv_forward.1} parent=35 // pred_check
        %p442 = pneg %p143
      $region38: #{monarch_conv_forward.1} parent=35 // pred_check_branch
        %444 = sbr.rel (%p442) target = $region40
      $region39: #{monarch_conv_forward.1} parent=35 // pred_region
        _
      $region40: #{monarch_conv_forward.1} parent=35 // pred_fallthru
        _
    $region36: #{monarch_conv_forward.1} parent=5 // pred_fallthru
      _
    %p445 = scmp.le.s32.totalorder 2, %s10
    // Predicated region
    $region41: #{monarch_conv_forward.1} parent=5 // pred_check
      %p446 = pneg %p445
    $region42: #{monarch_conv_forward.1} parent=5 // pred_check_branch
      %448 = sbr.rel (%p446) target = $region44
    $region43: #{monarch_conv_forward.1} parent=5 // pred_region
      %s449 = ssub.s32 %s10, 2
      // Predicated region
      $region45: #{monarch_conv_forward.1} parent=43 // pred_check
        %p450 = pneg %p149
      $region46: #{monarch_conv_forward.1} parent=43 // pred_check_branch
        %452 = sbr.rel (%p450) target = $region48
      $region47: #{monarch_conv_forward.1} parent=43 // pred_region
        %p453 = scmp.lt.s32.totalorder %s22, 1
        %s454 = scalar_select %p453, %s22, 1
        %p455 = scmp.lt.s32.totalorder %s21, 0
        %s456 = scalar_select %p455, %s21, 0
        %s457 = smul.addr %s454, 8
        %s458 = sadd.s32 %s456, %s457
        %s459 = smul.addr %s458, 8
        %s460 = scalar_lea.vmem %s4, %s459
      $region48: #{monarch_conv_forward.1} parent=43 // pred_fallthru
        _
    $region44: #{monarch_conv_forward.1} parent=5 // pred_fallthru
      _
  $region6: #{monarch_conv_forward.1} parent=0 // loop_footer
    %s14 = sadd.s32 1, %s10
  $region7: #{monarch_conv_forward.1} parent=0 // loop_footer_branch
    %9 = sbr.rel target = $region3
  $region8: #{monarch_conv_forward.1} parent=0 // loop_exit
    _

</llo_original>
